<compile_context>
chip_gen: v7x
topology: tpu7x:2x2x1
jax: 0.10.0
libtpu: 0.0.40
codegen_flags: <defaults>
</compile_context>

<pallas_src>
import functools
from typing import NamedTuple, Tuple

import jax
import jax.numpy as jnp
from jax.experimental import pallas as pl
from jax.experimental.pallas import tpu as pltpu


HIDDEN = (256, 128, 64, 32)  # fc1..fc4 output widths (fc5 -> action_size)


def _round_up(n: int, m: int) -> int:
    return ((n + m - 1) // m) * m


class PackMeta(NamedTuple):
    k1: int                     # fc1 contraction dim padded to 128 multiple
    offsets: Tuple[int, ...]    # row offset of fc2..fc5 inside the 128-wide slab
    k_dims: Tuple[int, ...]     # rows each of fc2..fc5 occupies in the slab
    state_size: int
    action_size: int


def init_params(key, state_size, action_size):
    """Mimics nn.Linear's U(-1/sqrt(fan_in), 1/sqrt(fan_in)) init.

    Returns list of (W [in, out], b [out]) f32 pairs (W transposed vs torch)."""
    dims = [state_size, *HIDDEN, action_size]
    params = []
    for i in range(5):
        fan_in, fan_out = dims[i], dims[i + 1]
        key, kw, kb = jax.random.split(key, 3)
        bound = 1.0 / jnp.sqrt(jnp.float32(fan_in))
        w = jax.random.uniform(kw, (fan_in, fan_out), jnp.float32,
                               minval=-bound, maxval=bound)
        b = jax.random.uniform(kb, (fan_out,), jnp.float32,
                               minval=-bound, maxval=bound)
        params.append((w, b))
    return params


def pack_params(params):
    """Pack fc1 separately (256 wide) and fc2..fc5 into one 128-wide slab.

    Zero padding of weight rows/cols and biases keeps results exact."""
    (w1, b1) = params[0]
    rest = params[1:]
    state_size, h1 = w1.shape                      # (s, 256)
    action_size = rest[-1][0].shape[1]
    assert h1 == 256
    assert action_size <= 128, "slab layout assumes action_size <= 128"

    k1 = _round_up(state_size, 128)
    w1p = jnp.zeros((k1, h1), jnp.bfloat16).at[:state_size, :].set(
        w1.astype(jnp.bfloat16))
    b1p = jnp.reshape(b1, (1, h1)).astype(jnp.float32)

    # fc2..fc5: K padded to a 128-multiple (matches the zero-padded activation
    # width), N padded to the 128-lane slab width.
    blocks, biases, offsets, k_dims = [], [], [], []
    off = 0
    for (w, b) in rest:
        kin, nout = w.shape
        kp = _round_up(kin, 128)
        blk = jnp.zeros((kp, 128), jnp.bfloat16)
        blk = blk.at[:kin, :nout].set(w.astype(jnp.bfloat16))
        blocks.append(blk)
        bias = jnp.zeros((1, 128), jnp.float32).at[0, :nout].set(
            b.astype(jnp.float32))
        biases.append(bias)
        offsets.append(off)
        k_dims.append(kp)
        off += kp

    w_slab = jnp.concatenate(blocks, axis=0)               # (640, 128) bf16
    b_slab = jnp.concatenate(
        biases + [jnp.zeros((8 - len(biases), 128), jnp.float32)], axis=0)

    meta = PackMeta(k1, tuple(offsets), tuple(k_dims), state_size, action_size)
    return w1p, b1p, w_slab, b_slab, meta


def _mlp_kernel(x_ref, w1_ref, b1_ref, w_ref, b_ref, o_ref,
                *, k1, offsets, k_dims):
    """Five back-to-back MXU matmuls; all operands VMEM-resident."""
    x = x_ref[...].astype(jnp.bfloat16)            # (tb, s)
    tb, s = x.shape
    if s < k1:
        # Zero-pad the contraction dim to the MXU-aligned width in registers
        # (no HBM cost); w1's padded rows are also zero.
        x = jnp.concatenate(
            [x, jnp.zeros((tb, k1 - s), jnp.bfloat16)], axis=1)

    # fc1: (tb, k1) @ (k1, 256) -> f32 acc, bias + ReLU on the VPU in f32.
    h = jnp.dot(x, w1_ref[...], preferred_element_type=jnp.float32)
    h = jnp.maximum(h + b1_ref[...], 0.0).astype(jnp.bfloat16)   # (tb, 256)

    # fc2..fc5 from the 128-wide packed slab (static, tile-aligned row slices).
    b_all = b_ref[...]                                            # (8, 128) f32
    n = len(offsets)
    for i in range(n):                                            # static unroll
        w_i = w_ref[offsets[i]:offsets[i] + k_dims[i], :]         # (K_i, 128)
        acc = jnp.dot(h, w_i, preferred_element_type=jnp.float32)
        acc = acc + b_all[i:i + 1, :]
        if i < n - 1:
            h = jnp.maximum(acc, 0.0).astype(jnp.bfloat16)
        else:
            o_ref[...] = acc.astype(o_ref.dtype)                  # bf16 store


def large_forward(x, w1p, b1p, w_slab, b_slab, meta: PackMeta):
    B, s = x.shape
    assert s == meta.state_size
    n_out_pad = 128  # lane-dense padded output width (action_size <= 128)

    # Batch tile: lane-dense sublane multiple; scales with B so large batches
    # are not per-step-overhead bound.  1024 keeps the footprint (~4 MiB)
    # inside v5e's 16 MiB default scoped VMEM and v7x's 64 MiB physical VMEM.
    if B >= 1024:
        tb = 1024
    elif B >= 256:
        tb = _round_up(B, 256)          # single grid step, full-MXU M multiple
    else:
        tb = _round_up(max(B, 8), 8)    # tiny batch, single step
    B_pad = _round_up(B, tb)

    x_in = x
    if B_pad != B:
        # Only batch-dim padding (zeros); no feature-dim inflation in HBM.
        x_in = jnp.zeros((B_pad, s), x.dtype).at[:B, :].set(x)

    kernel = functools.partial(_mlp_kernel, k1=meta.k1,
                               offsets=meta.offsets, k_dims=meta.k_dims)

    out_pad = pl.pallas_call(
        kernel,
        out_shape=jax.ShapeDtypeStruct((B_pad, n_out_pad), jnp.bfloat16),
        grid=(B_pad // tb,),
        in_specs=[
            pl.BlockSpec((tb, s), lambda i: (i, 0)),          # activations
            pl.BlockSpec(w1p.shape, lambda i: (0, 0)),        # fc1 W (resident)
            pl.BlockSpec(b1p.shape, lambda i: (0, 0)),        # fc1 b (resident)
            pl.BlockSpec(w_slab.shape, lambda i: (0, 0)),     # fc2..5 W slab
            pl.BlockSpec(b_slab.shape, lambda i: (0, 0)),     # fc2..5 b slab
        ],
        out_specs=pl.BlockSpec((tb, n_out_pad), lambda i: (i, 0)),
        compiler_params=pltpu.CompilerParams(
            # On v7x, pltpu.CORE_PARALLEL here would shard batch tiles across
            # the two TensorCores; "parallel" is kept for portable lowering.
            dimension_semantics=("parallel",)),
    )(x_in, w1p, b1p, w_slab, b_slab)

    return out_pad[:B, :meta.action_size].astype(jnp.float32)


large_forward_jit = jax.jit(large_forward, static_argnums=(5,))


def reference_forward(x, params):
    h = x
    for i, (w, b) in enumerate(params):
        h = h @ w + b
        if i < len(params) - 1:
            h = jnp.maximum(h, 0.0)
    return h


if __name__ == "__main__":
    key = jax.random.PRNGKey(0)
    batch, state_size, action_size = 2, 8, 4

    key, kx = jax.random.split(key)
    x = jax.random.normal(kx, (batch, state_size), jnp.float32)
    params = init_params(key, state_size, action_size)

    w1p, b1p, w_slab, b_slab, meta = pack_params(params)
    out = large_forward_jit(x, w1p, b1p, w_slab, b_slab, meta)
    jax.block_until_ready(out)

    ref = reference_forward(x, params)
    assert out.shape == (batch, action_size), out.shape
    # bf16 MXU operands (f32 accumulation) -> relaxed tolerance vs f32 ref.
    assert jnp.allclose(out, ref, atol=3e-2, rtol=3e-2), "mismatch vs reference"

    print("KERNEL_OK")
</pallas_src>

<mosaic_0001>
module attributes {stable_mosaic.version = 11 : i64} {
  func.func @_mlp_kernel(%arg0: i32, %arg1: memref<8x8xf32, #tpu.memory_space<vmem>>, %arg2: memref<128x256xbf16, #tpu.memory_space<vmem>>, %arg3: memref<1x256xf32, #tpu.memory_space<vmem>>, %arg4: memref<640x128xbf16, #tpu.memory_space<vmem>>, %arg5: memref<8x128xf32, #tpu.memory_space<vmem>>, %arg6: memref<8x128xbf16, #tpu.memory_space<vmem>>) attributes {dimension_semantics = [#tpu.dimension_semantics<parallel>], iteration_bounds = array<i64: 1>, scalar_prefetch = 0 : i64, scratch_operands = 0 : i64, tpu.core_type = #tpu.core_type<tc>, window_params = [{transform_indices = @transform_0, window_bounds = array<i64: 8, 8>}, {pipeline_mode = #tpu.pipeline_mode<synchronous>, transform_indices = @transform_1, window_bounds = array<i64: 128, 256>}, {pipeline_mode = #tpu.pipeline_mode<synchronous>, transform_indices = @transform_2, window_bounds = array<i64: 1, 256>}, {pipeline_mode = #tpu.pipeline_mode<synchronous>, transform_indices = @transform_3, window_bounds = array<i64: 640, 128>}, {pipeline_mode = #tpu.pipeline_mode<synchronous>, transform_indices = @transform_4, window_bounds = array<i64: 8, 128>}, {transform_indices = @transform_5, window_bounds = array<i64: 8, 128>}]} {
    %c0 = arith.constant 0 : index
    %c0_0 = arith.constant 0 : index
    %0 = vector.load %arg1[%c0, %c0_0] : memref<8x8xf32, #tpu.memory_space<vmem>>, vector<8x8xf32>
    %1 = arith.truncf %0 : vector<8x8xf32> to vector<8x8xbf16>
    %cst = arith.constant 0.000000e+00 : bf16
    %2 = vector.broadcast %cst : bf16 to vector<8x120xbf16>
    %3 = tpu.concatenate %1, %2 in 1 : vector<8x8xbf16>, vector<8x120xbf16> -> vector<8x128xbf16>
    %c0_1 = arith.constant 0 : index
    %c0_2 = arith.constant 0 : index
    %4 = vector.load %arg2[%c0_1, %c0_2] : memref<128x256xbf16, #tpu.memory_space<vmem>>, vector<128x256xbf16>
    %cst_3 = arith.constant dense<0.000000e+00> : vector<8x256xf32>
    %5 = tpu.matmul %3, %4, %cst_3 {dimension_numbers = #tpu.dot_dimension_numbers<[1], [0], [0], [1], [0, 0, 1, 1], [], []>} : vector<8x128xbf16>, vector<128x256xbf16>, vector<8x256xf32> -> vector<8x256xf32>
    %c0_4 = arith.constant 0 : index
    %c0_5 = arith.constant 0 : index
    %6 = vector.load %arg3[%c0_4, %c0_5] : memref<1x256xf32, #tpu.memory_space<vmem>>, vector<1x256xf32>
    %7 = vector.broadcast %6 : vector<1x256xf32> to vector<8x256xf32>
    %8 = arith.addf %5, %7 : vector<8x256xf32>
    %cst_6 = arith.constant 0.000000e+00 : f32
    %9 = vector.broadcast %cst_6 : f32 to vector<8x256xf32>
    %10 = arith.maximumf %8, %9 : vector<8x256xf32>
    %11 = arith.truncf %10 : vector<8x256xf32> to vector<8x256xbf16>
    %c0_7 = arith.constant 0 : index
    %c0_8 = arith.constant 0 : index
    %12 = vector.load %arg5[%c0_7, %c0_8] : memref<8x128xf32, #tpu.memory_space<vmem>>, vector<8x128xf32>
    %c0_9 = arith.constant 0 : index
    %c0_10 = arith.constant 0 : index
    %13 = vector.load %arg4[%c0_9, %c0_10] : memref<640x128xbf16, #tpu.memory_space<vmem>>, vector<256x128xbf16>
    %cst_11 = arith.constant dense<0.000000e+00> : vector<8x128xf32>
    %14 = tpu.matmul %11, %13, %cst_11 {dimension_numbers = #tpu.dot_dimension_numbers<[1], [0], [0], [1], [0, 0, 1, 1], [], []>} : vector<8x256xbf16>, vector<256x128xbf16>, vector<8x128xf32> -> vector<8x128xf32>
    %15 = vector.extract_strided_slice %12 {offsets = [0, 0], sizes = [1, 128], strides = [1, 1]} : vector<8x128xf32> to vector<1x128xf32>
    %16 = vector.broadcast %15 : vector<1x128xf32> to vector<8x128xf32>
    %17 = arith.addf %14, %16 : vector<8x128xf32>
    %cst_12 = arith.constant 0.000000e+00 : f32
    %18 = vector.broadcast %cst_12 : f32 to vector<8x128xf32>
    %19 = arith.maximumf %17, %18 : vector<8x128xf32>
    %20 = arith.truncf %19 : vector<8x128xf32> to vector<8x128xbf16>
    %c256 = arith.constant 256 : index
    %c0_13 = arith.constant 0 : index
    %21 = vector.load %arg4[%c256, %c0_13] : memref<640x128xbf16, #tpu.memory_space<vmem>>, vector<128x128xbf16>
    %cst_14 = arith.constant dense<0.000000e+00> : vector<8x128xf32>
    %22 = tpu.matmul %20, %21, %cst_14 {dimension_numbers = #tpu.dot_dimension_numbers<[1], [0], [0], [1], [0, 0, 1, 1], [], []>} : vector<8x128xbf16>, vector<128x128xbf16>, vector<8x128xf32> -> vector<8x128xf32>
    %23 = vector.extract_strided_slice %12 {offsets = [1, 0], sizes = [1, 128], strides = [1, 1]} : vector<8x128xf32> to vector<1x128xf32>
    %24 = vector.broadcast %23 : vector<1x128xf32> to vector<8x128xf32>
    %25 = arith.addf %22, %24 : vector<8x128xf32>
    %cst_15 = arith.constant 0.000000e+00 : f32
    %26 = vector.broadcast %cst_15 : f32 to vector<8x128xf32>
    %27 = arith.maximumf %25, %26 : vector<8x128xf32>
    %28 = arith.truncf %27 : vector<8x128xf32> to vector<8x128xbf16>
    %c384 = arith.constant 384 : index
    %c0_16 = arith.constant 0 : index
    %29 = vector.load %arg4[%c384, %c0_16] : memref<640x128xbf16, #tpu.memory_space<vmem>>, vector<128x128xbf16>
    %cst_17 = arith.constant dense<0.000000e+00> : vector<8x128xf32>
    %30 = tpu.matmul %28, %29, %cst_17 {dimension_numbers = #tpu.dot_dimension_numbers<[1], [0], [0], [1], [0, 0, 1, 1], [], []>} : vector<8x128xbf16>, vector<128x128xbf16>, vector<8x128xf32> -> vector<8x128xf32>
    %31 = vector.extract_strided_slice %12 {offsets = [2, 0], sizes = [1, 128], strides = [1, 1]} : vector<8x128xf32> to vector<1x128xf32>
    %32 = vector.broadcast %31 : vector<1x128xf32> to vector<8x128xf32>
    %33 = arith.addf %30, %32 : vector<8x128xf32>
    %cst_18 = arith.constant 0.000000e+00 : f32
    %34 = vector.broadcast %cst_18 : f32 to vector<8x128xf32>
    %35 = arith.maximumf %33, %34 : vector<8x128xf32>
    %36 = arith.truncf %35 : vector<8x128xf32> to vector<8x128xbf16>
    %c512 = arith.constant 512 : index
    %c0_19 = arith.constant 0 : index
    %37 = vector.load %arg4[%c512, %c0_19] : memref<640x128xbf16, #tpu.memory_space<vmem>>, vector<128x128xbf16>
    %cst_20 = arith.constant dense<0.000000e+00> : vector<8x128xf32>
    %38 = tpu.matmul %36, %37, %cst_20 {dimension_numbers = #tpu.dot_dimension_numbers<[1], [0], [0], [1], [0, 0, 1, 1], [], []>} : vector<8x128xbf16>, vector<128x128xbf16>, vector<8x128xf32> -> vector<8x128xf32>
    %39 = vector.extract_strided_slice %12 {offsets = [3, 0], sizes = [1, 128], strides = [1, 1]} : vector<8x128xf32> to vector<1x128xf32>
    %40 = vector.broadcast %39 : vector<1x128xf32> to vector<8x128xf32>
    %41 = arith.addf %38, %40 : vector<8x128xf32>
    %42 = arith.truncf %41 : vector<8x128xf32> to vector<8x128xbf16>
    %c0_21 = arith.constant 0 : index
    %c0_22 = arith.constant 0 : index
    %43 = vector.load %arg6[%c0_21, %c0_22] : memref<8x128xbf16, #tpu.memory_space<vmem>>, vector<8x128xbf16>
    tpu.vector_store %arg6[%c0_21, %c0_22], %42 {strides = array<i32>} : memref<8x128xbf16, #tpu.memory_space<vmem>>, vector<8x128xbf16>,
    return
  }
  func.func @transform_0(%arg0: i32) -> (i32, i32) {
    %c0_i32 = arith.constant 0 : i32
    %c0_i32_0 = arith.constant 0 : i32
    return %arg0, %c0_i32 : i32, i32
  }
  func.func @transform_1(%arg0: i32) -> (i32, i32) {
    %c0_i32 = arith.constant 0 : i32
    %c0_i32_0 = arith.constant 0 : i32
    %c0_i32_1 = arith.constant 0 : i32
    return %c0_i32, %c0_i32_0 : i32, i32
  }
  func.func @transform_2(%arg0: i32) -> (i32, i32) {
    %c0_i32 = arith.constant 0 : i32
    %c0_i32_0 = arith.constant 0 : i32
    %c0_i32_1 = arith.constant 0 : i32
    return %c0_i32, %c0_i32_0 : i32, i32
  }
  func.func @transform_3(%arg0: i32) -> (i32, i32) {
    %c0_i32 = arith.constant 0 : i32
    %c0_i32_0 = arith.constant 0 : i32
    %c0_i32_1 = arith.constant 0 : i32
    return %c0_i32, %c0_i32_0 : i32, i32
  }
  func.func @transform_4(%arg0: i32) -> (i32, i32) {
    %c0_i32 = arith.constant 0 : i32
    %c0_i32_0 = arith.constant 0 : i32
    %c0_i32_1 = arith.constant 0 : i32
    return %c0_i32, %c0_i32_0 : i32, i32
  }
  func.func @transform_5(%arg0: i32) -> (i32, i32) {
    %c0_i32 = arith.constant 0 : i32
    %c0_i32_0 = arith.constant 0 : i32
    return %arg0, %c0_i32 : i32, i32
  }
}

</mosaic_0001>

<llo_original>
// kernel: large_forward.1
$region0: #{large_forward.1}
  #allocation0 [shape = 'u32[]', space=smem, size = 0x4, offset = 0x4, fixed_abs, tag = 'smem constant byte address 0x4 - core index']
  #allocation1 [shape = 'u32[144,128]{1,0:T(1,128)}', space=vmem, size = 0x12000, scoped, tag = 'internal scratch']
  %s0 = inlined_call_operand.vmem [shape: f32[8,8], index: 0, kind: input, shape index: {}]
  %s1 = inlined_call_operand.hbm [shape: bf16[128,256], index: 1, kind: input, shape index: {}]
  %s2 = inlined_call_operand.vmem [shape: f32[1,256], index: 2, kind: input, shape index: {}]
  %s3 = inlined_call_operand.hbm [shape: bf16[640,128], index: 3, kind: input, shape index: {}]
  %s4 = inlined_call_operand.vmem [shape: f32[8,128], index: 4, kind: input, shape index: {}]
  %s5 = inlined_call_operand.vmem [shape: bf16[8,128], index: 5, kind: output, shape index: {}]
  %s6 = sld [smem:[#allocation0]]
  $region38: #{large_forward.1} parent=0
    _
  %s8 = ssub.s32 1, %s6
  %s9 = scalar_select 0, %s8, %s6
  $region1: #{large_forward.1} parent=0
    #allocation2 [shape = 'u8[65536]{0}', space=vmem, size = 0x10000, scoped, tag = 'input window, operand 1, single buffered']
    #allocation3 [shape = 's32[1]{0}', space=sflag, size = 0x4, scoped, tag = 'scoped memory for large_forward.1']
    #allocation4 [shape = 'u8[163840]{0}', space=vmem, size = 0x28000, scoped, tag = 'input window, operand 3, single buffered']
    #allocation5 [shape = 's32[1]{0}', space=sflag, size = 0x4, scoped, tag = 'scoped memory for large_forward.1']
    %10 = vsyncpa [#allocation3], 0
    %11 = vsyncpa [#allocation5], 0
    // Predicated region
    $region2: #{large_forward.1} parent=1 // pred_check
      _
    $region3: #{large_forward.1} parent=1 // pred_check_branch
      %13 = sbr.rel (0) target = $region5
    $region4: #{large_forward.1} parent=1 // pred_region
      _
    $region5: #{large_forward.1} parent=1 // pred_fallthru
      _
    // Predicated region
    $region6: #{large_forward.1} parent=1 // pred_check
      _
    $region7: #{large_forward.1} parent=1 // pred_check_branch
      %15 = sbr.rel (0) target = $region9
    $region8: #{large_forward.1} parent=1 // pred_region
      %s17 = ssub.s32 2048, 2048
      %18 = vsyncadd [#allocation3], %s17
      %s19 = sshll.u32 [#allocation2], 4
      %s20 = int_to_ptr.vmem [resolvable:$true] %s19
      %25 = dma.hbm_to_vmem [thread:$0]  %s1, 2048, %s20, [#allocation3], 128, 128, 8
    $region9: #{large_forward.1} parent=1 // pred_fallthru
      _
    // Predicated region
    $region10: #{large_forward.1} parent=1 // pred_check
      _
    $region11: #{large_forward.1} parent=1 // pred_check_branch
      %27 = sbr.rel (0) target = $region13
    $region12: #{large_forward.1} parent=1 // pred_region
      _
    $region13: #{large_forward.1} parent=1 // pred_fallthru
      _
    // Predicated region
    $region14: #{large_forward.1} parent=1 // pred_check
      _
    $region15: #{large_forward.1} parent=1 // pred_check_branch
      %29 = sbr.rel (0) target = $region17
    $region16: #{large_forward.1} parent=1 // pred_region
      %s31 = ssub.s32 5120, 5120
      %32 = vsyncadd [#allocation5], %s31
      %s33 = sshll.u32 [#allocation4], 4
      %s34 = int_to_ptr.vmem [resolvable:$true] %s33
      %39 = dma.hbm_to_vmem [thread:$0]  %s3, 5120, %s34, [#allocation5], 64, 64, 4
    $region17: #{large_forward.1} parent=1 // pred_fallthru
      _
    // Predicated region
    $region18: #{large_forward.1} parent=1 // pred_check
      _
    $region19: #{large_forward.1} parent=1 // pred_check_branch
      %41 = sbr.rel (0) target = $region21
    $region20: #{large_forward.1} parent=1 // pred_region
      _
    $region21: #{large_forward.1} parent=1 // pred_fallthru
      _
    // Predicated region
    $region22: #{large_forward.1} parent=1 // pred_check
      _
    $region23: #{large_forward.1} parent=1 // pred_check_branch
      %43 = sbr.rel (0) target = $region25
    $region24: #{large_forward.1} parent=1 // pred_region
      %44 = dma.done [#allocation3], 2048
    $region25: #{large_forward.1} parent=1 // pred_fallthru
      _
    // Predicated region
    $region26: #{large_forward.1} parent=1 // pred_check
      _
    $region27: #{large_forward.1} parent=1 // pred_check_branch
      %46 = sbr.rel (0) target = $region29
    $region28: #{large_forward.1} parent=1 // pred_region
      %47 = dma.done [#allocation5], 5120
    $region29: #{large_forward.1} parent=1 // pred_fallthru
      _
    %v49 = vld [vmem:[%s0] sm:$0xff]
    %v50 = vpack.c.bf16 %v49, %v49
    %vm51 = vcmask 64512
    %v54 = vsel %vm51, %v50, 0
    %v56 = vld [vmem:[#allocation2] sm:$0xff]
    %v57 = vld [vmem:[#allocation2 + $0x8] sm:$0xff]
    %v58 = vld [vmem:[#allocation2 + $0x10] sm:$0xff]
    %v59 = vld [vmem:[#allocation2 + $0x18] sm:$0xff]
    %v60 = vld [vmem:[#allocation2 + $0x20] sm:$0xff]
    %v61 = vld [vmem:[#allocation2 + $0x28] sm:$0xff]
    %v62 = vld [vmem:[#allocation2 + $0x30] sm:$0xff]
    %v63 = vld [vmem:[#allocation2 + $0x38] sm:$0xff]
    %v64 = vld [vmem:[#allocation2 + $0x40] sm:$0xff]
    %v65 = vld [vmem:[#allocation2 + $0x48] sm:$0xff]
    %v66 = vld [vmem:[#allocation2 + $0x50] sm:$0xff]
    %v67 = vld [vmem:[#allocation2 + $0x58] sm:$0xff]
    %v68 = vld [vmem:[#allocation2 + $0x60] sm:$0xff]
    %v69 = vld [vmem:[#allocation2 + $0x68] sm:$0xff]
    %v70 = vld [vmem:[#allocation2 + $0x70] sm:$0xff]
    %v71 = vld [vmem:[#allocation2 + $0x78] sm:$0xff]
    %v72 = vld [vmem:[%s2] sm:$0x3]
    %v74 = vlaneseq
    %v75 = vshrl.u32 %v74, 7
    %v76 = vsub.s32 0, %v75
    %v77 = vrot.slane %v72, %v76
    %v78 = vlaneseq
    %v79 = vshrl.u32 %v78, 7
    %v80 = vsub.s32 1, %v79
    %v81 = vrot.slane %v72, %v80
    %v100 = vunpack.c.l.b16 %v56
    %v101 = vunpack.c.h.b16 %v56
    %v102 = vunpack.c.l.b16 %v57
    %v103 = vunpack.c.h.b16 %v57
    %v104 = vunpack.c.l.b16 %v58
    %v105 = vunpack.c.h.b16 %v58
    %v106 = vunpack.c.l.b16 %v59
    %v107 = vunpack.c.h.b16 %v59
    %v108 = vunpack.c.l.b16 %v60
    %v109 = vunpack.c.h.b16 %v60
    %v110 = vunpack.c.l.b16 %v61
    %v111 = vunpack.c.h.b16 %v61
    %v112 = vunpack.c.l.b16 %v62
    %v113 = vunpack.c.h.b16 %v62
    %v114 = vunpack.c.l.b16 %v63
    %v115 = vunpack.c.h.b16 %v63
    %v116 = vunpack.c.l.b16 %v64
    %v117 = vunpack.c.h.b16 %v64
    %v118 = vunpack.c.l.b16 %v65
    %v119 = vunpack.c.h.b16 %v65
    %v120 = vunpack.c.l.b16 %v66
    %v121 = vunpack.c.h.b16 %v66
    %v122 = vunpack.c.l.b16 %v67
    %v123 = vunpack.c.h.b16 %v67
    %v124 = vunpack.c.l.b16 %v68
    %v125 = vunpack.c.h.b16 %v68
    %v126 = vunpack.c.l.b16 %v69
    %v127 = vunpack.c.h.b16 %v69
    %v128 = vunpack.c.l.b16 %v70
    %v129 = vunpack.c.h.b16 %v70
    %v130 = vunpack.c.l.b16 %v71
    %v131 = vunpack.c.h.b16 %v71
    %v132 = vpack.c.b16 %v102, %v100
    %v133 = vpack.c.b16 %v103, %v101
    %v134 = vpack.c.b16 %v106, %v104
    %v135 = vpack.c.b16 %v107, %v105
    %v136 = vpack.c.b16 %v110, %v108
    %v137 = vpack.c.b16 %v111, %v109
    %v138 = vpack.c.b16 %v114, %v112
    %v139 = vpack.c.b16 %v115, %v113
    %v140 = vpack.c.b16 %v118, %v116
    %v141 = vpack.c.b16 %v119, %v117
    %v142 = vpack.c.b16 %v122, %v120
    %v143 = vpack.c.b16 %v123, %v121
    %v144 = vpack.c.b16 %v126, %v124
    %v145 = vpack.c.b16 %v127, %v125
    %v146 = vpack.c.b16 %v130, %v128
    %v147 = vpack.c.b16 %v131, %v129
    %164 = vmatprep.subr.bf16.mxu0 %v133
    %165 = vmatpush1.bf16.msra.mxu0 %v132
    %166 = vmatprep.subr.bf16.mxu0 %v135
    %167 = vmatpush1.bf16.msra.mxu0 %v134
    %168 = vmatprep.subr.bf16.mxu0 %v137
    %169 = vmatpush1.bf16.msra.mxu0 %v136
    %170 = vmatprep.subr.bf16.mxu0 %v139
    %171 = vmatpush1.bf16.msra.mxu0 %v138
    %172 = vmatprep.subr.bf16.mxu0 %v141
    %173 = vmatpush1.bf16.msra.mxu0 %v140
    %174 = vmatprep.subr.bf16.mxu0 %v143
    %175 = vmatpush1.bf16.msra.mxu0 %v142
    %176 = vmatprep.subr.bf16.mxu0 %v145
    %177 = vmatpush1.bf16.msra.mxu0 %v144
    %178 = vmatprep.subr.bf16.mxu0 %v147
    %179 = vmatpush1.bf16.msra.mxu0 %v146
    %180 = vmatprep.subr.bf16.mxu0 0
    %181 = vmatpush1.bf16.msra.mxu0 0
    %182 = vmatprep.subr.bf16.mxu0 0
    %183 = vmatpush1.bf16.msra.mxu0 0
    %184 = vmatprep.subr.bf16.mxu0 0
    %185 = vmatpush1.bf16.msra.mxu0 0
    %186 = vmatprep.subr.bf16.mxu0 0
    %187 = vmatpush1.bf16.msra.mxu0 0
    %188 = vmatprep.subr.bf16.mxu0 0
    %189 = vmatpush1.bf16.msra.mxu0 0
    %190 = vmatprep.subr.bf16.mxu0 0
    %191 = vmatpush1.bf16.msra.mxu0 0
    %192 = vmatprep.subr.bf16.mxu0 0
    %193 = vmatpush1.bf16.msra.mxu0 0
    %194 = vmatprep.subr.bf16.mxu0 0
    %195 = vmatpush1.bf16.msra.mxu0 0
    %196 = vmatprep.mubr.bf16.mxu0 0
    %197 = vmatmul.mubr.bf16.gmra.mrb[0].mxu0 %v54
    %v198 = vpop.f32.mrb[0].mxu0
    %v199 = vadd.f32 %v77, %v198
    %v200 = vpop.f32.mrb[0].mxu0
    %v201 = vadd.f32 %v81, %v200
    %v202 = vpop.f32.mrb[0].mxu0
    %v203 = vpop.f32.mrb[0].mxu0
    %204 = vdwg.mxu0
    %v205 = vmax.f32 %v199, 0.0
    %v206 = vmax.f32 %v201, 0.0
    %v207 = vpack.c.bf16 %v205, %v205
    %v208 = vpack.c.bf16 %v206, %v206
    %v209 = vld [vmem:[%s4] sm:$0xff]
    %v210 = vld [vmem:[#allocation4] sm:$0xf]
    %v211 = vld [vmem:[#allocation4 + $0x4] sm:$0xf]
    %v212 = vld [vmem:[#allocation4 + $0x8] sm:$0xf]
    %v213 = vld [vmem:[#allocation4 + $0xc] sm:$0xf]
    %v214 = vld [vmem:[#allocation4 + $0x10] sm:$0xf]
    %v215 = vld [vmem:[#allocation4 + $0x14] sm:$0xf]
    %v216 = vld [vmem:[#allocation4 + $0x18] sm:$0xf]
    %v217 = vld [vmem:[#allocation4 + $0x1c] sm:$0xf]
    %v218 = vld [vmem:[#allocation4 + $0x20] sm:$0xf]
    %v219 = vld [vmem:[#allocation4 + $0x24] sm:$0xf]
    %v220 = vld [vmem:[#allocation4 + $0x28] sm:$0xf]
    %v221 = vld [vmem:[#allocation4 + $0x2c] sm:$0xf]
    %v222 = vld [vmem:[#allocation4 + $0x30] sm:$0xf]
    %v223 = vld [vmem:[#allocation4 + $0x34] sm:$0xf]
    %v224 = vld [vmem:[#allocation4 + $0x38] sm:$0xf]
    %v225 = vld [vmem:[#allocation4 + $0x3c] sm:$0xf]
    %v226 = vld [vmem:[#allocation4 + $0x40] sm:$0xf]
    %v227 = vld [vmem:[#allocation4 + $0x44] sm:$0xf]
    %v228 = vld [vmem:[#allocation4 + $0x48] sm:$0xf]
    %v229 = vld [vmem:[#allocation4 + $0x4c] sm:$0xf]
    %v230 = vld [vmem:[#allocation4 + $0x50] sm:$0xf]
    %v231 = vld [vmem:[#allocation4 + $0x54] sm:$0xf]
    %v232 = vld [vmem:[#allocation4 + $0x58] sm:$0xf]
    %v233 = vld [vmem:[#allocation4 + $0x5c] sm:$0xf]
    %v234 = vld [vmem:[#allocation4 + $0x60] sm:$0xf]
    %v235 = vld [vmem:[#allocation4 + $0x64] sm:$0xf]
    %v236 = vld [vmem:[#allocation4 + $0x68] sm:$0xf]
    %v237 = vld [vmem:[#allocation4 + $0x6c] sm:$0xf]
    %v238 = vld [vmem:[#allocation4 + $0x70] sm:$0xf]
    %v239 = vld [vmem:[#allocation4 + $0x74] sm:$0xf]
    %v240 = vld [vmem:[#allocation4 + $0x78] sm:$0xf]
    %v241 = vld [vmem:[#allocation4 + $0x7c] sm:$0xf]
    %v242 = vlaneseq
    %v243 = vshrl.u32 %v242, 7
    %v244 = vsub.s32 0, %v243
    %v245 = vrot.slane %v209, %v244
    %v278 = vunpack.c.l.b16 %v210
    %v279 = vunpack.c.l.b16 %v211
    %v280 = vunpack.c.l.b16 %v212
    %v281 = vunpack.c.l.b16 %v213
    %v282 = vunpack.c.l.b16 %v214
    %v283 = vunpack.c.l.b16 %v215
    %v284 = vunpack.c.l.b16 %v216
    %v285 = vunpack.c.l.b16 %v217
    %v286 = vunpack.c.l.b16 %v218
    %v287 = vunpack.c.l.b16 %v219
    %v288 = vunpack.c.l.b16 %v220
    %v289 = vunpack.c.l.b16 %v221
    %v290 = vunpack.c.l.b16 %v222
    %v291 = vunpack.c.l.b16 %v223
    %v292 = vunpack.c.l.b16 %v224
    %v293 = vunpack.c.l.b16 %v225
    %v294 = vunpack.c.l.b16 %v226
    %v295 = vunpack.c.l.b16 %v227
    %v296 = vunpack.c.l.b16 %v228
    %v297 = vunpack.c.l.b16 %v229
    %v298 = vunpack.c.l.b16 %v230
    %v299 = vunpack.c.l.b16 %v231
    %v300 = vunpack.c.l.b16 %v232
    %v301 = vunpack.c.l.b16 %v233
    %v302 = vunpack.c.l.b16 %v234
    %v303 = vunpack.c.l.b16 %v235
    %v304 = vunpack.c.l.b16 %v236
    %v305 = vunpack.c.l.b16 %v237
    %v306 = vunpack.c.l.b16 %v238
    %v307 = vunpack.c.l.b16 %v239
    %v308 = vunpack.c.l.b16 %v240
    %v309 = vunpack.c.l.b16 %v241
    %v310 = vpack.c.b16 %v279, %v278
    %v311 = vpack.c.b16 %v281, %v280
    %v312 = vpack.c.b16 %v283, %v282
    %v313 = vpack.c.b16 %v285, %v284
    %v314 = vpack.c.b16 %v287, %v286
    %v315 = vpack.c.b16 %v289, %v288
    %v316 = vpack.c.b16 %v291, %v290
    %v317 = vpack.c.b16 %v293, %v292
    %v318 = vpack.c.b16 %v295, %v294
    %v319 = vpack.c.b16 %v297, %v296
    %v320 = vpack.c.b16 %v299, %v298
    %v321 = vpack.c.b16 %v301, %v300
    %v322 = vpack.c.b16 %v303, %v302
    %v323 = vpack.c.b16 %v305, %v304
    %v324 = vpack.c.b16 %v307, %v306
    %v325 = vpack.c.b16 %v309, %v308
    %342 = vmatprep.subr.bf16.mxu0 0
    %343 = vmatpush1.bf16.msra.mxu0 %v310
    %344 = vmatprep.subr.bf16.mxu0 0
    %345 = vmatpush1.bf16.msra.mxu0 %v311
    %346 = vmatprep.subr.bf16.mxu0 0
    %347 = vmatpush1.bf16.msra.mxu0 %v312
    %348 = vmatprep.subr.bf16.mxu0 0
    %349 = vmatpush1.bf16.msra.mxu0 %v313
    %350 = vmatprep.subr.bf16.mxu0 0
    %351 = vmatpush1.bf16.msra.mxu0 %v314
    %352 = vmatprep.subr.bf16.mxu0 0
    %353 = vmatpush1.bf16.msra.mxu0 %v315
    %354 = vmatprep.subr.bf16.mxu0 0
    %355 = vmatpush1.bf16.msra.mxu0 %v316
    %356 = vmatprep.subr.bf16.mxu0 0
    %357 = vmatpush1.bf16.msra.mxu0 %v317
    %358 = vmatprep.subr.bf16.mxu0 0
    %359 = vmatpush1.bf16.msra.mxu0 %v318
    %360 = vmatprep.subr.bf16.mxu0 0
    %361 = vmatpush1.bf16.msra.mxu0 %v319
    %362 = vmatprep.subr.bf16.mxu0 0
    %363 = vmatpush1.bf16.msra.mxu0 %v320
    %364 = vmatprep.subr.bf16.mxu0 0
    %365 = vmatpush1.bf16.msra.mxu0 %v321
    %366 = vmatprep.subr.bf16.mxu0 0
    %367 = vmatpush1.bf16.msra.mxu0 %v322
    %368 = vmatprep.subr.bf16.mxu0 0
    %369 = vmatpush1.bf16.msra.mxu0 %v323
    %370 = vmatprep.subr.bf16.mxu0 0
    %371 = vmatpush1.bf16.msra.mxu0 %v324
    %372 = vmatprep.subr.bf16.mxu0 0
    %373 = vmatpush1.bf16.msra.mxu0 %v325
    %374 = vmatprep.mubr.bf16.mxu0 %v208
    %375 = vmatmul.mubr.bf16.gmra.mrb[0].mxu0 %v207
    %v376 = vpop.f32.mrb[0].mxu0
    %v377 = vadd.f32 %v245, %v376
    %v378 = vpop.f32.mrb[0].mxu0
    %v379 = vpop.f32.mrb[0].mxu0
    %v380 = vpop.f32.mrb[0].mxu0
    %381 = vdwg.mxu0
    %v382 = vmax.f32 %v377, 0.0
    %v383 = vpack.c.bf16 %v382, %v382
    %v384 = vld [vmem:[#allocation4 + $0x80] sm:$0xf]
    %v385 = vld [vmem:[#allocation4 + $0x84] sm:$0xf]
    %v386 = vld [vmem:[#allocation4 + $0x88] sm:$0xf]
    %v387 = vld [vmem:[#allocation4 + $0x8c] sm:$0xf]
    %v388 = vld [vmem:[#allocation4 + $0x90] sm:$0xf]
    %v389 = vld [vmem:[#allocation4 + $0x94] sm:$0xf]
    %v390 = vld [vmem:[#allocation4 + $0x98] sm:$0xf]
    %v391 = vld [vmem:[#allocation4 + $0x9c] sm:$0xf]
    %v392 = vld [vmem:[#allocation4 + $0xa0] sm:$0xf]
    %v393 = vld [vmem:[#allocation4 + $0xa4] sm:$0xf]
    %v394 = vld [vmem:[#allocation4 + $0xa8] sm:$0xf]
    %v395 = vld [vmem:[#allocation4 + $0xac] sm:$0xf]
    %v396 = vld [vmem:[#allocation4 + $0xb0] sm:$0xf]
    %v397 = vld [vmem:[#allocation4 + $0xb4] sm:$0xf]
    %v398 = vld [vmem:[#allocation4 + $0xb8] sm:$0xf]
    %v399 = vld [vmem:[#allocation4 + $0xbc] sm:$0xf]
    %v400 = vlaneseq
    %v401 = vshrl.u32 %v400, 7
    %v402 = vsub.s32 1, %v401
    %v403 = vrot.slane %v209, %v402
    %v420 = vunpack.c.l.b16 %v384
    %v421 = vunpack.c.l.b16 %v385
    %v422 = vunpack.c.l.b16 %v386
    %v423 = vunpack.c.l.b16 %v387
    %v424 = vunpack.c.l.b16 %v388
    %v425 = vunpack.c.l.b16 %v389
    %v426 = vunpack.c.l.b16 %v390
    %v427 = vunpack.c.l.b16 %v391
    %v428 = vunpack.c.l.b16 %v392
    %v429 = vunpack.c.l.b16 %v393
    %v430 = vunpack.c.l.b16 %v394
    %v431 = vunpack.c.l.b16 %v395
    %v432 = vunpack.c.l.b16 %v396
    %v433 = vunpack.c.l.b16 %v397
    %v434 = vunpack.c.l.b16 %v398
    %v435 = vunpack.c.l.b16 %v399
    %v436 = vpack.c.b16 %v421, %v420
    %v437 = vpack.c.b16 %v423, %v422
    %v438 = vpack.c.b16 %v425, %v424
    %v439 = vpack.c.b16 %v427, %v426
    %v440 = vpack.c.b16 %v429, %v428
    %v441 = vpack.c.b16 %v431, %v430
    %v442 = vpack.c.b16 %v433, %v432
    %v443 = vpack.c.b16 %v435, %v434
    %452 = vmatprep.subr.bf16.mxu0 0
    %453 = vmatpush1.bf16.msra.mxu0 %v436
    %454 = vmatprep.subr.bf16.mxu0 0
    %455 = vmatpush1.bf16.msra.mxu0 %v437
    %456 = vmatprep.subr.bf16.mxu0 0
    %457 = vmatpush1.bf16.msra.mxu0 %v438
    %458 = vmatprep.subr.bf16.mxu0 0
    %459 = vmatpush1.bf16.msra.mxu0 %v439
    %460 = vmatprep.subr.bf16.mxu0 0
    %461 = vmatpush1.bf16.msra.mxu0 %v440
    %462 = vmatprep.subr.bf16.mxu0 0
    %463 = vmatpush1.bf16.msra.mxu0 %v441
    %464 = vmatprep.subr.bf16.mxu0 0
    %465 = vmatpush1.bf16.msra.mxu0 %v442
    %466 = vmatprep.subr.bf16.mxu0 0
    %467 = vmatpush1.bf16.msra.mxu0 %v443
    %468 = vmatprep.subr.bf16.mxu0 0
    %469 = vmatpush1.bf16.msra.mxu0 0
    %470 = vmatprep.subr.bf16.mxu0 0
    %471 = vmatpush1.bf16.msra.mxu0 0
    %472 = vmatprep.subr.bf16.mxu0 0
    %473 = vmatpush1.bf16.msra.mxu0 0
    %474 = vmatprep.subr.bf16.mxu0 0
    %475 = vmatpush1.bf16.msra.mxu0 0
    %476 = vmatprep.subr.bf16.mxu0 0
    %477 = vmatpush1.bf16.msra.mxu0 0
    %478 = vmatprep.subr.bf16.mxu0 0
    %479 = vmatpush1.bf16.msra.mxu0 0
    %480 = vmatprep.subr.bf16.mxu0 0
    %481 = vmatpush1.bf16.msra.mxu0 0
    %482 = vmatprep.subr.bf16.mxu0 0
    %483 = vmatpush1.bf16.msra.mxu0 0
    %484 = vmatprep.mubr.bf16.mxu0 0
    %485 = vmatmul.mubr.bf16.gmra.mrb[0].mxu0 %v383
    %v486 = vpop.f32.mrb[0].mxu0
    %v487 = vadd.f32 %v403, %v486
    %v488 = vpop.f32.mrb[0].mxu0
    %v489 = vpop.f32.mrb[0].mxu0
    %v490 = vpop.f32.mrb[0].mxu0
    %491 = vdwg.mxu0
    %v492 = vmax.f32 %v487, 0.0
    %v493 = vpack.c.bf16 %v492, %v492
    %v494 = vld [vmem:[#allocation4 + $0xc0] sm:$0xf]
    %v495 = vld [vmem:[#allocation4 + $0xc4] sm:$0xf]
    %v496 = vld [vmem:[#allocation4 + $0xc8] sm:$0xf]
    %v497 = vld [vmem:[#allocation4 + $0xcc] sm:$0xf]
    %v498 = vld [vmem:[#allocation4 + $0xd0] sm:$0xf]
    %v499 = vld [vmem:[#allocation4 + $0xd4] sm:$0xf]
    %v500 = vld [vmem:[#allocation4 + $0xd8] sm:$0xf]
    %v501 = vld [vmem:[#allocation4 + $0xdc] sm:$0xf]
    %v502 = vld [vmem:[#allocation4 + $0xe0] sm:$0xf]
    %v503 = vld [vmem:[#allocation4 + $0xe4] sm:$0xf]
    %v504 = vld [vmem:[#allocation4 + $0xe8] sm:$0xf]
    %v505 = vld [vmem:[#allocation4 + $0xec] sm:$0xf]
    %v506 = vld [vmem:[#allocation4 + $0xf0] sm:$0xf]
    %v507 = vld [vmem:[#allocation4 + $0xf4] sm:$0xf]
    %v508 = vld [vmem:[#allocation4 + $0xf8] sm:$0xf]
    %v509 = vld [vmem:[#allocation4 + $0xfc] sm:$0xf]
    %v510 = vlaneseq
    %v511 = vshrl.u32 %v510, 7
    %v512 = vsub.s32 2, %v511
    %v513 = vrot.slane %v209, %v512
    %v530 = vunpack.c.l.b16 %v494
    %v531 = vunpack.c.l.b16 %v495
    %v532 = vunpack.c.l.b16 %v496
    %v533 = vunpack.c.l.b16 %v497
    %v534 = vunpack.c.l.b16 %v498
    %v535 = vunpack.c.l.b16 %v499
    %v536 = vunpack.c.l.b16 %v500
    %v537 = vunpack.c.l.b16 %v501
    %v538 = vunpack.c.l.b16 %v502
    %v539 = vunpack.c.l.b16 %v503
    %v540 = vunpack.c.l.b16 %v504
    %v541 = vunpack.c.l.b16 %v505
    %v542 = vunpack.c.l.b16 %v506
    %v543 = vunpack.c.l.b16 %v507
    %v544 = vunpack.c.l.b16 %v508
    %v545 = vunpack.c.l.b16 %v509
    %v546 = vpack.c.b16 %v531, %v530
    %v547 = vpack.c.b16 %v533, %v532
    %v548 = vpack.c.b16 %v535, %v534
    %v549 = vpack.c.b16 %v537, %v536
    %v550 = vpack.c.b16 %v539, %v538
    %v551 = vpack.c.b16 %v541, %v540
    %v552 = vpack.c.b16 %v543, %v542
    %v553 = vpack.c.b16 %v545, %v544
    %562 = vmatprep.subr.bf16.mxu0 0
    %563 = vmatpush1.bf16.msra.mxu0 %v546
    %564 = vmatprep.subr.bf16.mxu0 0
    %565 = vmatpush1.bf16.msra.mxu0 %v547
    %566 = vmatprep.subr.bf16.mxu0 0
    %567 = vmatpush1.bf16.msra.mxu0 %v548
    %568 = vmatprep.subr.bf16.mxu0 0
    %569 = vmatpush1.bf16.msra.mxu0 %v549
    %570 = vmatprep.subr.bf16.mxu0 0
    %571 = vmatpush1.bf16.msra.mxu0 %v550
    %572 = vmatprep.subr.bf16.mxu0 0
    %573 = vmatpush1.bf16.msra.mxu0 %v551
    %574 = vmatprep.subr.bf16.mxu0 0
    %575 = vmatpush1.bf16.msra.mxu0 %v552
    %576 = vmatprep.subr.bf16.mxu0 0
    %577 = vmatpush1.bf16.msra.mxu0 %v553
    %578 = vmatprep.subr.bf16.mxu0 0
    %579 = vmatpush1.bf16.msra.mxu0 0
    %580 = vmatprep.subr.bf16.mxu0 0
    %581 = vmatpush1.bf16.msra.mxu0 0
    %582 = vmatprep.subr.bf16.mxu0 0
    %583 = vmatpush1.bf16.msra.mxu0 0
    %584 = vmatprep.subr.bf16.mxu0 0
    %585 = vmatpush1.bf16.msra.mxu0 0
    %586 = vmatprep.subr.bf16.mxu0 0
    %587 = vmatpush1.bf16.msra.mxu0 0
    %588 = vmatprep.subr.bf16.mxu0 0
    %589 = vmatpush1.bf16.msra.mxu0 0
    %590 = vmatprep.subr.bf16.mxu0 0
    %591 = vmatpush1.bf16.msra.mxu0 0
    %592 = vmatprep.subr.bf16.mxu0 0
    %593 = vmatpush1.bf16.msra.mxu0 0
    %594 = vmatprep.mubr.bf16.mxu0 0
    %595 = vmatmul.mubr.bf16.gmra.mrb[0].mxu0 %v493
    %v596 = vpop.f32.mrb[0].mxu0
    %v597 = vadd.f32 %v513, %v596
    %v598 = vpop.f32.mrb[0].mxu0
    %v599 = vpop.f32.mrb[0].mxu0
    %v600 = vpop.f32.mrb[0].mxu0
    %601 = vdwg.mxu0
    %v602 = vmax.f32 %v597, 0.0
    %v603 = vpack.c.bf16 %v602, %v602
    %v604 = vld [vmem:[#allocation4 + $0x100] sm:$0xf]
    %v605 = vld [vmem:[#allocation4 + $0x104] sm:$0xf]
    %v606 = vld [vmem:[#allocation4 + $0x108] sm:$0xf]
    %v607 = vld [vmem:[#allocation4 + $0x10c] sm:$0xf]
    %v608 = vld [vmem:[#allocation4 + $0x110] sm:$0xf]
    %v609 = vld [vmem:[#allocation4 + $0x114] sm:$0xf]
    %v610 = vld [vmem:[#allocation4 + $0x118] sm:$0xf]
    %v611 = vld [vmem:[#allocation4 + $0x11c] sm:$0xf]
    %v612 = vld [vmem:[#allocation4 + $0x120] sm:$0xf]
    %v613 = vld [vmem:[#allocation4 + $0x124] sm:$0xf]
    %v614 = vld [vmem:[#allocation4 + $0x128] sm:$0xf]
    %v615 = vld [vmem:[#allocation4 + $0x12c] sm:$0xf]
    %v616 = vld [vmem:[#allocation4 + $0x130] sm:$0xf]
    %v617 = vld [vmem:[#allocation4 + $0x134] sm:$0xf]
    %v618 = vld [vmem:[#allocation4 + $0x138] sm:$0xf]
    %v619 = vld [vmem:[#allocation4 + $0x13c] sm:$0xf]
    %v620 = vlaneseq
    %v621 = vshrl.u32 %v620, 7
    %v622 = vsub.s32 3, %v621
    %v623 = vrot.slane %v209, %v622
    %v640 = vunpack.c.l.b16 %v604
    %v641 = vunpack.c.l.b16 %v605
    %v642 = vunpack.c.l.b16 %v606
    %v643 = vunpack.c.l.b16 %v607
    %v644 = vunpack.c.l.b16 %v608
    %v645 = vunpack.c.l.b16 %v609
    %v646 = vunpack.c.l.b16 %v610
    %v647 = vunpack.c.l.b16 %v611
    %v648 = vunpack.c.l.b16 %v612
    %v649 = vunpack.c.l.b16 %v613
    %v650 = vunpack.c.l.b16 %v614
    %v651 = vunpack.c.l.b16 %v615
    %v652 = vunpack.c.l.b16 %v616
    %v653 = vunpack.c.l.b16 %v617
    %v654 = vunpack.c.l.b16 %v618
    %v655 = vunpack.c.l.b16 %v619
    %v656 = vpack.c.b16 %v641, %v640
    %v657 = vpack.c.b16 %v643, %v642
    %v658 = vpack.c.b16 %v645, %v644
    %v659 = vpack.c.b16 %v647, %v646
    %v660 = vpack.c.b16 %v649, %v648
    %v661 = vpack.c.b16 %v651, %v650
    %v662 = vpack.c.b16 %v653, %v652
    %v663 = vpack.c.b16 %v655, %v654
    %672 = vmatprep.subr.bf16.mxu0 0
    %673 = vmatpush1.bf16.msra.mxu0 %v656
    %674 = vmatprep.subr.bf16.mxu0 0
    %675 = vmatpush1.bf16.msra.mxu0 %v657
    %676 = vmatprep.subr.bf16.mxu0 0
    %677 = vmatpush1.bf16.msra.mxu0 %v658
    %678 = vmatprep.subr.bf16.mxu0 0
    %679 = vmatpush1.bf16.msra.mxu0 %v659
    %680 = vmatprep.subr.bf16.mxu0 0
    %681 = vmatpush1.bf16.msra.mxu0 %v660
    %682 = vmatprep.subr.bf16.mxu0 0
    %683 = vmatpush1.bf16.msra.mxu0 %v661
    %684 = vmatprep.subr.bf16.mxu0 0
    %685 = vmatpush1.bf16.msra.mxu0 %v662
    %686 = vmatprep.subr.bf16.mxu0 0
    %687 = vmatpush1.bf16.msra.mxu0 %v663
    %688 = vmatprep.subr.bf16.mxu0 0
    %689 = vmatpush1.bf16.msra.mxu0 0
    %690 = vmatprep.subr.bf16.mxu0 0
    %691 = vmatpush1.bf16.msra.mxu0 0
    %692 = vmatprep.subr.bf16.mxu0 0
    %693 = vmatpush1.bf16.msra.mxu0 0
    %694 = vmatprep.subr.bf16.mxu0 0
    %695 = vmatpush1.bf16.msra.mxu0 0
    %696 = vmatprep.subr.bf16.mxu0 0
    %697 = vmatpush1.bf16.msra.mxu0 0
    %698 = vmatprep.subr.bf16.mxu0 0
    %699 = vmatpush1.bf16.msra.mxu0 0
    %700 = vmatprep.subr.bf16.mxu0 0
    %701 = vmatpush1.bf16.msra.mxu0 0
    %702 = vmatprep.subr.bf16.mxu0 0
    %703 = vmatpush1.bf16.msra.mxu0 0
    %704 = vmatprep.mubr.bf16.mxu0 0
    %705 = vmatmul.mubr.bf16.gmra.mrb[0].mxu0 %v603
    %v706 = vpop.f32.mrb[0].mxu0
    %v707 = vadd.f32 %v623, %v706
    %v708 = vpop.f32.mrb[0].mxu0
    %v709 = vpop.f32.mrb[0].mxu0
    %v710 = vpop.f32.mrb[0].mxu0
    %711 = vdwg.mxu0
    %v712 = vpack.c.bf16 %v707, %v707
    %713 = vst [vmem:[%s5] sm:$0xf] %v712
    // Predicated region
    $region30: #{large_forward.1} parent=1 // pred_check
      _
    $region31: #{large_forward.1} parent=1 // pred_check_branch
      %715 = sbr.rel (0) target = $region33
    $region32: #{large_forward.1} parent=1 // pred_region
      _
    $region33: #{large_forward.1} parent=1 // pred_fallthru
      _
    // Predicated region
    $region34: #{large_forward.1} parent=1 // pred_check
      _
    $region35: #{large_forward.1} parent=1 // pred_check_branch
      %717 = sbr.rel (0) target = $region37
    $region36: #{large_forward.1} parent=1 // pred_region
      _
    $region37: #{large_forward.1} parent=1 // pred_fallthru
      _
    %718 = vsyncpa [#allocation3], 1
    %719 = vsyncpa [#allocation5], 1

</llo_original>
